<compile_context>
chip_gen: v7x
topology: tpu7x:2x2x1
jax: 0.10.0
libtpu: 0.0.40
codegen_flags: <defaults>
</compile_context>

<pallas_src>
import math

import jax
import jax.numpy as jnp
from jax.experimental import pallas as pl
from jax.experimental.pallas import tpu as pltpu

_SHIFT = math.log(2.0)  # the registered buffer 'shift'


def _make_kernel(compute_dtype):
    def kernel(x_ref, o_ref):
        # Numerically stable softplus: max(x, 0) + log1p(exp(-|x|)), then shift.
        x = x_ref[...].astype(compute_dtype)
        sp = jnp.maximum(x, 0.0) + jnp.log1p(jnp.exp(-jnp.abs(x)))
        o_ref[...] = (sp - _SHIFT).astype(o_ref.dtype)

    return kernel


def _round_up(a, b):
    return -(-a // b) * b


def _sublane_quantum(dtype) -> int:
    # 8 sublanes for 32-bit dtypes, 16 for 16-bit, 32 for 8-bit packed dtypes.
    bits = jnp.dtype(dtype).itemsize * 8
    return max(8, 256 // bits)


def _detect_tpu():
    """Best-effort TPU introspection; never raises. Returns (num_tensorcores, gen)."""
    cores, gen = 1, ""
    try:
        kind = jax.devices()[0].device_kind.lower()
        for g in ("v7", "v6", "v5", "v4"):
            if g in kind:
                gen = g
                break
    except Exception:
        pass
    try:
        info = pltpu.get_tpu_info()
        for name in ("num_cores", "core_count", "num_tensorcores", "tensorcores_per_chip"):
            v = getattr(info, name, None)
            if v:
                cores = max(cores, int(v))
                break
    except Exception:
        pass
    if gen == "v7":
        cores = max(cores, 2)  # v7x has 2 TensorCores per chip
    return cores, gen


def _pick_tile_rows(rows, row_bytes, total_bytes, sub, target_block_bytes, num_cores):
    """Tile rows: a multiple of the sublane quantum sized from the byte target.

    Partial last blocks are fine for a pure elementwise op (OOB reads produce
    garbage whose writes are masked), so no exact-divisor requirement.  The
    multi-block split is only forced on multi-TC chips (v7x).
    """
    if rows <= sub:
        return rows
    group_bytes = row_bytes * sub
    tr = max(1, target_block_bytes // group_bytes) * sub
    if num_cores >= 2 and total_bytes >= (4 << 20) and rows > 2 * sub:
        # v7x: make sure both TensorCores get at least one block.
        tr = min(tr, _round_up(pl.cdiv(rows, num_cores), sub))
    if tr >= rows:
        return rows  # single full-extent block
    return max(tr, sub)


def shifted_softplus(x, *, target_block_bytes=4 << 20, min_pallas_elems=None,
                     donate_input=False):
    """Applies softplus(x) - log(2) elementwise via a Pallas TPU kernel.

    min_pallas_elems: below this element count fall back to fused XLA softplus
      (kernel launch overhead dominates for tiny tensors). Defaults to 128K
      elements; pass 0 to force the Pallas path.
    """
    orig_shape, orig_dtype = x.shape, x.dtype
    n = x.size
    if n == 0:
        return x
    if min_pallas_elems is None:
        min_pallas_elems = 128 * 1024
    if n < min_pallas_elems:
        return (jax.nn.softplus(x.astype(jnp.float32)) - _SHIFT).astype(orig_dtype)

    itemsize = jnp.dtype(orig_dtype).itemsize
    sub = _sublane_quantum(orig_dtype)
    num_cores, gen = _detect_tpu()

    # bf16 EUP path on v6e/v7x halves transcendental cost for bf16 inputs so the
    # kernel stays HBM-bound at v7x's ~3.2 TB/s; v5e has no bf16 EUP -> f32.
    if orig_dtype == jnp.bfloat16 and gen in ("v6", "v7"):
        compute_dtype = jnp.bfloat16
    else:
        compute_dtype = jnp.float32

    # ---- choose a 2-D view with zero pad / slice copies ---------------------
    lanes = None
    for cand in (1024, 512, 256, 128):
        if n % cand == 0:
            lanes = cand
            break

    pad = 0
    if lanes is not None:
        # Free (bitcast-equivalent) reshape of contiguous data to a lane-dense slab.
        rows = n // lanes
        slab = x.reshape(rows, lanes)
    else:
        # Ragged element count: collapse to (leading, rest) -- still a free
        # reshape, no pad/slice.  Lane dim == full array dim, so the (8,128)
        # BlockSpec constraint is satisfied; the trailing lane-tile is masked.
        rows = orig_shape[0] if x.ndim >= 2 else 1
        lanes = n // rows
        min_block_pad = _round_up(min(rows, sub), sub) * _round_up(lanes, 128) * itemsize
        if min_block_pad <= (8 << 20):
            slab = x.reshape(rows, lanes)
        else:
            # Very large ragged tensor whose rows don't fit VMEM: pad the flat
            # view to a 128-lane slab (one extra read+write; rare fallback).
            lanes = 128
            rows = pl.cdiv(n, lanes)
            pad = rows * lanes - n
            slab = jnp.pad(x.reshape(-1), (0, pad)).reshape(rows, lanes)

    lanes_pad = _round_up(lanes, 128)          # VMEM-tile footprint per row
    row_bytes = lanes_pad * itemsize
    total_bytes = n * itemsize

    tr = _pick_tile_rows(rows, row_bytes, total_bytes, sub, target_block_bytes, num_cores)
    grid = (pl.cdiv(rows, tr),)

    block_pad_bytes = _round_up(tr, sub) * row_bytes
    # Double-buffered in + out plus compute temporaries, with headroom; default
    # (4 MiB blocks) lands at 32 MiB -- inside scoped defaults everywhere and
    # well under v7x's 64 MiB per-TC physical VMEM.
    vmem_limit = int(max(32 << 20, 4 * block_pad_bytes + (8 << 20)))

    out = pl.pallas_call(
        _make_kernel(compute_dtype),
        out_shape=jax.ShapeDtypeStruct((rows, lanes), orig_dtype),
        grid_spec=pltpu.PrefetchScalarGridSpec(
            num_scalar_prefetch=0,
            grid=grid,
            in_specs=[pl.BlockSpec((tr, lanes), lambda i: (i, 0))],
            out_specs=pl.BlockSpec((tr, lanes), lambda i: (i, 0)),
        ),
        compiler_params=pltpu.CompilerParams(
            # TODO(synk): verify "parallel" actually core-shards the row axis on
            # v7x; if not, switch it to pltpu.CORE_PARALLEL for the 2-TC split.
            dimension_semantics=("parallel",),
            vmem_limit_bytes=vmem_limit,
        ),
        input_output_aliases={0: 0} if donate_input else {},
    )(slab)

    if pad:
        out = out.reshape(-1)[:n]
    return out.reshape(orig_shape)


if __name__ == "__main__":
    key = jax.random.PRNGKey(0)
    k1, k2, k3 = jax.random.split(key, 3)

    # NCHW-style feature map consistent with SchNet usage: batch=2, C=4, H=W=16.
    x = jax.random.normal(k1, (2, 4, 16, 16), dtype=jnp.float32) * 3.0
    y = jax.block_until_ready(shifted_softplus(x, min_pallas_elems=0))
    ref = jax.nn.softplus(x) - _SHIFT
    assert y.shape == x.shape and y.dtype == x.dtype
    assert float(jnp.max(jnp.abs(y - ref))) < 1e-5, "mismatch vs reference"

    # Larger aligned input: exercises the lane-dense tiled path + size gate.
    x_big = jax.random.normal(k2, (16, 64, 256), dtype=jnp.float32) * 3.0
    y_big = jax.block_until_ready(shifted_softplus(x_big))
    ref_big = jax.nn.softplus(x_big) - _SHIFT
    assert y_big.shape == x_big.shape and y_big.dtype == x_big.dtype
    assert float(jnp.max(jnp.abs(y_big - ref_big))) < 1e-5, "mismatch vs reference (big)"

    # Ragged shape: exercises the pad-free collapsed-2D path.
    x_rag = jax.random.normal(k3, (3, 5, 7), dtype=jnp.float32) * 3.0
    y_rag = jax.block_until_ready(shifted_softplus(x_rag, min_pallas_elems=0))
    ref_rag = jax.nn.softplus(x_rag) - _SHIFT
    assert y_rag.shape == x_rag.shape and y_rag.dtype == x_rag.dtype
    assert float(jnp.max(jnp.abs(y_rag - ref_rag))) < 1e-5, "mismatch vs reference (ragged)"

    print("KERNEL_OK")
</pallas_src>

<mosaic_0001>
module attributes {stable_mosaic.version = 11 : i64} {
  func.func @kernel(%arg0: i32, %arg1: memref<2x1024xf32, #tpu.memory_space<vmem>>, %arg2: memref<2x1024xf32, #tpu.memory_space<vmem>>) attributes {dimension_semantics = [#tpu.dimension_semantics<parallel>], iteration_bounds = array<i64: 1>, scalar_prefetch = 0 : i64, scratch_operands = 0 : i64, tpu.core_type = #tpu.core_type<tc>, window_params = [{transform_indices = @transform_0, window_bounds = array<i64: 2, 1024>}, {transform_indices = @transform_1, window_bounds = array<i64: 2, 1024>}]} {
    %c0 = arith.constant 0 : index
    %c0_0 = arith.constant 0 : index
    %0 = vector.load %arg1[%c0, %c0_0] : memref<2x1024xf32, #tpu.memory_space<vmem>>, vector<2x1024xf32>
    %cst = arith.constant 0.000000e+00 : f32
    %1 = vector.broadcast %cst : f32 to vector<2x1024xf32>
    %2 = arith.maximumf %0, %1 : vector<2x1024xf32>
    %3 = math.absf %0 : vector<2x1024xf32>
    %cst_1 = arith.constant 0.000000e+00 : f32
    %4 = vector.broadcast %cst_1 : f32 to vector<2x1024xf32>
    %5 = arith.subf %4, %3 : vector<2x1024xf32>
    %6 = math.exp %5 : vector<2x1024xf32>
    %7 = math.log1p %6 : vector<2x1024xf32>
    %8 = arith.addf %2, %7 : vector<2x1024xf32>
    %cst_2 = arith.constant 0.693147182 : f32
    %9 = vector.broadcast %cst_2 : f32 to vector<2x1024xf32>
    %10 = arith.subf %8, %9 : vector<2x1024xf32>
    %c0_3 = arith.constant 0 : index
    %c0_4 = arith.constant 0 : index
    %11 = vector.load %arg2[%c0_3, %c0_4] : memref<2x1024xf32, #tpu.memory_space<vmem>>, vector<2x1024xf32>
    tpu.vector_store %arg2[%c0_3, %c0_4], %10 {strides = array<i32>} : memref<2x1024xf32, #tpu.memory_space<vmem>>, vector<2x1024xf32>,
    return
  }
  func.func @transform_0(%arg0: i32) -> (i32, i32) {
    %c0_i32 = arith.constant 0 : i32
    %c0_i32_0 = arith.constant 0 : i32
    return %arg0, %c0_i32 : i32, i32
  }
  func.func @transform_1(%arg0: i32) -> (i32, i32) {
    %c0_i32 = arith.constant 0 : i32
    %c0_i32_0 = arith.constant 0 : i32
    return %arg0, %c0_i32 : i32, i32
  }
}

</mosaic_0001>

<llo_original>
// kernel: tpu_custom_call.1
$region0: #{tpu_custom_call.1}
  #allocation0 [shape = 'u32[]', space=smem, size = 0x4, offset = 0x4, fixed_abs, tag = 'smem constant byte address 0x4 - core index']
  #allocation1 [shape = 'u32[144,128]{1,0:T(1,128)}', space=vmem, size = 0x12000, scoped, tag = 'internal scratch']
  %s0 = inlined_call_operand.hbm [shape: f32[2,1024], index: 0, kind: input, shape index: {}]
  %s1 = inlined_call_operand.hbm [shape: f32[2,1024], index: 1, kind: output, shape index: {}]
  %s2 = sld [smem:[#allocation0]]
  $region18: #{tpu_custom_call.1} parent=0
    _
  %s4 = ssub.s32 1, %s2
  %s5 = scalar_select 0, %s4, %s2
  $region1: #{tpu_custom_call.1} parent=0
    #allocation2 [shape = 'u8[8192]{0}', space=vmem, size = 0x2000, scoped, tag = 'input window, operand 0, single buffered']
    #allocation3 [shape = 's32[1]{0}', space=sflag, size = 0x4, scoped, tag = 'scoped memory for tpu_custom_call.1']
    #allocation4 [shape = 's32[1]{0}', space=sflag, size = 0x4, scoped, tag = 'scoped memory for tpu_custom_call.1']
    #allocation5 [shape = 'u8[8192]{0}', space=vmem, size = 0x2000, scoped, tag = 'output window, operand 0, single buffered']
    %6 = vsyncpa [#allocation3], 0
    %7 = vsyncpa [#allocation4], 0
    // Predicated region
    $region2: #{tpu_custom_call.1} parent=1 // pred_check
      _
    $region3: #{tpu_custom_call.1} parent=1 // pred_check_branch
      %9 = sbr.rel (0) target = $region5
    $region4: #{tpu_custom_call.1} parent=1 // pred_region
      %s11 = ssub.s32 256, 256
      %12 = vsyncadd [#allocation3], %s11
      %s14 = sshll.u32 [#allocation2], 4
      %s15 = int_to_ptr.vmem [resolvable:$true] %s14
      %17 = dma.hbm_to_vmem [thread:$0]  %s0, 256, %s15, [#allocation3]
    $region5: #{tpu_custom_call.1} parent=1 // pred_fallthru
      _
    // Predicated region
    $region6: #{tpu_custom_call.1} parent=1 // pred_check
      _
    $region7: #{tpu_custom_call.1} parent=1 // pred_check_branch
      %19 = sbr.rel (0) target = $region9
    $region8: #{tpu_custom_call.1} parent=1 // pred_region
      %20 = dma.done [#allocation3], 256
    $region9: #{tpu_custom_call.1} parent=1 // pred_fallthru
      _
    %v21 = vld [vmem:[#allocation2] sm:$0xff]
    %v22 = vld [vmem:[#allocation2 + $0x8] sm:$0xff]
    %v23 = vmax.f32 %v21, 0.0
    %v24 = vmax.f32 %v22, 0.0
    %v25 = vand.u32 2147483647, %v21
    %v26 = vand.u32 2147483647, %v22
    %v27 = vsub.f32 0.0, %v25
    %v28 = vsub.f32 0.0, %v26
    %v29 = vmul.f32 %v27, 1.442695
    %v30 = vpow.pop %v29
    %v31 = vmul.f32 %v28, 1.442695
    %v32 = vpow.pop %v31
    %v33 = vadd.f32 %v30, 1.0
    %v34 = vlog2.pop %v33
    %v35 = vmul.f32 %v34, 0.6931472
    %v36 = vmul.f32 -0.5, %v30
    %v37 = vadd.f32 %v36, 1.0
    %v38 = vmul.f32 %v37, %v30
    %v39 = vand.u32 2147483647, %v30
    %vm40 = vcmp.lt.f32.partialorder %v39, 0.0004427343
    %v41 = vsel %vm40, %v38, %v35
    %v42 = vadd.f32 %v32, 1.0
    %v43 = vlog2.pop %v42
    %v44 = vmul.f32 %v43, 0.6931472
    %v45 = vmul.f32 -0.5, %v32
    %v46 = vadd.f32 %v45, 1.0
    %v47 = vmul.f32 %v46, %v32
    %v48 = vand.u32 2147483647, %v32
    %vm49 = vcmp.lt.f32.partialorder %v48, 0.0004427343
    %v50 = vsel %vm49, %v47, %v44
    %v51 = vadd.f32 %v23, %v41
    %v52 = vadd.f32 %v24, %v50
    %v53 = vsub.f32 %v51, 0.6931472
    %v54 = vsub.f32 %v52, 0.6931472
    %55 = vst [vmem:[#allocation5] sm:$0xff] %v53
    %56 = vst [vmem:[#allocation5 + $0x8] sm:$0xff] %v54
    // Predicated region
    $region10: #{tpu_custom_call.1} parent=1 // pred_check
      _
    $region11: #{tpu_custom_call.1} parent=1 // pred_check_branch
      %58 = sbr.rel (0) target = $region13
    $region12: #{tpu_custom_call.1} parent=1 // pred_region
      %s60 = ssub.s32 256, 256
      %61 = vsyncadd [#allocation4], %s60
      %s63 = sshll.u32 [#allocation5], 4
      %s64 = int_to_ptr.vmem [resolvable:$true] %s63
      %66 = dma.vmem_to_hbm [thread:$0]  %s64, 256, %s1, [#allocation4]
    $region13: #{tpu_custom_call.1} parent=1 // pred_fallthru
      _
    // Predicated region
    $region14: #{tpu_custom_call.1} parent=1 // pred_check
      _
    $region15: #{tpu_custom_call.1} parent=1 // pred_check_branch
      %68 = sbr.rel (0) target = $region17
    $region16: #{tpu_custom_call.1} parent=1 // pred_region
      %69 = dma.done [#allocation4], 256
    $region17: #{tpu_custom_call.1} parent=1 // pred_fallthru
      _
    %70 = vsyncpa [#allocation3], 1
    %71 = vsyncpa [#allocation4], 1

</llo_original>
